<compile_context>
chip_gen: v5e
topology: v5e:2x2
jax: 0.10.0
libtpu: 0.0.40
codegen_flags: <defaults>
</compile_context>

<pallas_src>
import functools

import jax
import jax.numpy as jnp
import numpy as np
from jax.experimental import pallas as pl
from jax.experimental.pallas import tpu as pltpu


def _pick_tile(total, candidates=(2048, 1024, 512, 256, 128)):
    """Largest candidate tile that evenly divides `total`; fall back to full extent."""
    for c in candidates:
        if total % c == 0:
            return c
    return total  # block == full array dim is always legal


def _pick_channel_block(cin, max_ct=16):
    """Largest divisor of cin that is <= max_ct (so the in-kernel unroll stays short)."""
    if cin <= max_ct:
        return cin
    for c in range(max_ct, 0, -1):
        if cin % c == 0:
            return c
    return 1


# ---------------------------------------------------------------------------
# Kernel 1: complex per-mode channel mixing
#   out[b,o,m] = sum_i x[b,i,m] * w[i,o,m]   (complex arithmetic)
# Layouts: x (Cin, B, Mp), w (Cin, Cout, Mp), out (B, Cout, Mp); Mp % 128 == 0
# so every store is lane-dense.
# Grid: (Mp // Mt, Cin // CT).  The CT-channel sub-block is reduced INSIDE the
# kernel (vreg accumulator, static unroll); the grid axis over channel blocks
# is "arbitrary" (last) with the output block resident across it.  For small
# Cin the second grid axis has a single step and the output is stored once.
# ---------------------------------------------------------------------------
def _spectral_mix_kernel(xr_ref, xi_ref, wr_ref, wi_ref, or_ref, oi_ref):
    ct = xr_ref.shape[0]                      # static channel sub-block size
    acc_r = jnp.zeros(or_ref.shape, jnp.float32)
    acc_i = jnp.zeros(oi_ref.shape, jnp.float32)
    for c in range(ct):                       # static unroll: accumulation stays in vregs
        xr = xr_ref[c][:, None, :]            # (B, 1, Mt)
        xi = xi_ref[c][:, None, :]
        wr = wr_ref[c][None, :, :]            # (1, Cout, Mt)
        wi = wi_ref[c][None, :, :]
        # plain 4-multiply complex product: cheaper than Karatsuba on the VPU
        acc_r = acc_r + (xr * wr - xi * wi)
        acc_i = acc_i + (xr * wi + xi * wr)

    ci = pl.program_id(1)

    @pl.when(ci == 0)
    def _():
        or_ref[...] = acc_r
        oi_ref[...] = acc_i

    @pl.when(ci > 0)
    def _():
        or_ref[...] += acc_r
        oi_ref[...] += acc_i


def spectral_mix(xr, xi, wr, wi):
    Cin, B, Mp = xr.shape
    Cout = wr.shape[1]
    assert Mp % 128 == 0, "mode axis must be padded to a multiple of 128"
    Mt = _pick_tile(Mp, (1024, 512, 256, 128))
    CT = _pick_channel_block(Cin)
    x_spec = pl.BlockSpec((CT, B, Mt), lambda mi, ci: (ci, 0, mi))
    w_spec = pl.BlockSpec((CT, Cout, Mt), lambda mi, ci: (ci, 0, mi))
    o_spec = pl.BlockSpec((B, Cout, Mt), lambda mi, ci: (0, 0, mi))
    return pl.pallas_call(
        _spectral_mix_kernel,
        grid=(Mp // Mt, Cin // CT),
        in_specs=[x_spec, x_spec, w_spec, w_spec],
        out_specs=(o_spec, o_spec),
        out_shape=(jax.ShapeDtypeStruct((B, Cout, Mp), jnp.float32),
                   jax.ShapeDtypeStruct((B, Cout, Mp), jnp.float32)),
        compiler_params=pltpu.CompilerParams(
            dimension_semantics=("parallel", "arbitrary")),
    )(xr, xi, wr, wi)


# ---------------------------------------------------------------------------
# Kernel 2: fused 1x1 skip conv (channel matmul) + bias + add spectral branch
#           + exact (erf) GELU + outer residual, tiled over (batch, H*W).
# Channel-major layout keeps H*W on the lane axis -> lane-dense loads/stores.
# ---------------------------------------------------------------------------
def _fused_skip_gelu_kernel(w_ref, b_ref, x_ref, xfc_ref, o_ref):
    w = w_ref[...]                                        # (Cout, Cin)
    x = x_ref[0]                                          # (Cin, TN)
    skip = jnp.dot(w, x, preferred_element_type=jnp.float32) + b_ref[...]
    z = skip + xfc_ref[0]                                 # + spectral branch
    inv_sqrt2 = np.float32(0.7071067811865476)
    gelu = 0.5 * z * (1.0 + jax.lax.erf(z * inv_sqrt2))   # nn.GELU (exact / erf)
    o_ref[0] = gelu + x                                   # outer residual (Cin == Cout)


def fused_skip_gelu(w, b, x3, xfc3):
    B, Cin, HW = x3.shape
    Cout = w.shape[0]
    TN = _pick_tile(HW)
    return pl.pallas_call(
        _fused_skip_gelu_kernel,
        grid=(B, HW // TN),
        in_specs=[
            pl.BlockSpec((Cout, Cin), lambda bb, nn: (0, 0)),
            pl.BlockSpec((Cout, 1), lambda bb, nn: (0, 0)),
            pl.BlockSpec((1, Cin, TN), lambda bb, nn: (bb, 0, nn)),
            pl.BlockSpec((1, Cout, TN), lambda bb, nn: (bb, 0, nn)),
        ],
        out_specs=pl.BlockSpec((1, Cout, TN), lambda bb, nn: (bb, 0, nn)),
        out_shape=jax.ShapeDtypeStruct((B, Cout, HW), jnp.float32),
        compiler_params=pltpu.CompilerParams(
            dimension_semantics=("parallel", "parallel")),
    )(w, b, x3, xfc3)


# ---------------------------------------------------------------------------
# Parameter init (deterministic, synthetic) and full forward pass.
# ---------------------------------------------------------------------------
def init_params(key, in_ch, out_ch, n_modes):
    m1, m2 = n_modes
    M = 2 * m1 * m2
    M_pad = ((M + 127) // 128) * 128
    k1, k2, k5, k6 = jax.random.split(key, 4)
    scale = 1.0 / (in_ch * out_ch)
    # dense (factorization=None) complex spectral weights, one block per freq corner,
    # stored as (Cin, Cout, M_pad) real / imag with zero padding on the mode axis.
    w_re = scale * jax.random.normal(k1, (in_ch, out_ch, 2 * m1, m2), jnp.float32)
    w_im = scale * jax.random.normal(k2, (in_ch, out_ch, 2 * m1, m2), jnp.float32)
    pad = ((0, 0), (0, 0), (0, M_pad - M))
    w_re = jnp.pad(w_re.reshape(in_ch, out_ch, M), pad)
    w_im = jnp.pad(w_im.reshape(in_ch, out_ch, M), pad)
    # 1x1 conv skip: Conv2d(in_ch, out_ch, kernel_size=1) default init
    bound = 1.0 / np.sqrt(in_ch)
    skip_w = jax.random.uniform(k5, (out_ch, in_ch), jnp.float32, -bound, bound)
    skip_b = jax.random.uniform(k6, (out_ch, 1), jnp.float32, -bound, bound)
    return dict(w_re=w_re, w_im=w_im, skip_w=skip_w, skip_b=skip_b)


@functools.partial(jax.jit, static_argnames=("n_modes",))
def fourier_layer2d(x, params, *, n_modes):
    B, Cin, H, W = x.shape
    m1, m2 = n_modes                      # static Python ints (jit static arg)
    M = 2 * m1 * m2
    M_pad = params['w_re'].shape[-1]
    Cout = params['skip_w'].shape[0]
    assert Cin == Cout, "outer residual (x_act + x) requires in_ch == out_ch"

    # --- spectral conv branch ---
    # TODO(synk): rfft2/irfft2 have no Pallas primitive; FFTs stay in plain JAX.
    x_ft = jnp.fft.rfft2(x, axes=(-2, -1))                        # (B, Cin, H, W//2+1) c64
    xc = jnp.concatenate([x_ft[:, :, :m1, :m2],                   # positive freqs
                          x_ft[:, :, H - m1:, :m2]], axis=2)      # negative freqs
    xc = jnp.transpose(xc, (1, 0, 2, 3)).reshape(Cin, B, M)       # tiny tensor, cheap
    pad = ((0, 0), (0, 0), (0, M_pad - M))
    xr = jnp.pad(jnp.real(xc).astype(jnp.float32), pad)
    xi = jnp.pad(jnp.imag(xc).astype(jnp.float32), pad)
    o_re, o_im = spectral_mix(xr, xi, params['w_re'], params['w_im'])
    o_c = jax.lax.complex(o_re[:, :, :M], o_im[:, :, :M]).reshape(B, Cout, 2 * m1, m2)
    out_ft = jnp.zeros((B, Cout, H, W // 2 + 1), jnp.complex64)
    out_ft = out_ft.at[:, :, :m1, :m2].set(o_c[:, :, :m1])
    out_ft = out_ft.at[:, :, H - m1:, :m2].set(o_c[:, :, m1:])
    x_fc = jnp.fft.irfft2(out_ft, s=(H, W), axes=(-2, -1)).astype(jnp.float32)

    # --- fused skip conv + GELU + residual (pure reshapes, no transposes) ---
    HW = H * W
    out = fused_skip_gelu(params['skip_w'], params['skip_b'],
                          x.reshape(B, Cin, HW), x_fc.reshape(B, Cout, HW))
    return out.reshape(B, Cout, H, W)


if __name__ == "__main__":
    B, C, H, W = 2, 4, 16, 16          # in_ch == out_ch == 4 (residual requires it)
    n_modes = (4, 4)
    key = jax.random.PRNGKey(0)
    kx, kp = jax.random.split(key)
    x = jax.random.normal(kx, (B, C, H, W), jnp.float32)
    params = init_params(kp, C, C, n_modes)

    y = fourier_layer2d(x, params, n_modes=n_modes)
    jax.block_until_ready(y)
    assert y.shape == (B, C, H, W) and y.dtype == jnp.float32
    assert bool(jnp.all(jnp.isfinite(y)))
    print("KERNEL_OK")
</pallas_src>

<mosaic_0001>
module attributes {stable_mosaic.version = 11 : i64} {
  func.func @_spectral_mix_kernel(%arg0: i32, %arg1: i32, %arg2: memref<4x2x128xf32, #tpu.memory_space<vmem>>, %arg3: memref<4x2x128xf32, #tpu.memory_space<vmem>>, %arg4: memref<4x4x128xf32, #tpu.memory_space<vmem>>, %arg5: memref<4x4x128xf32, #tpu.memory_space<vmem>>, %arg6: memref<2x4x128xf32, #tpu.memory_space<vmem>>, %arg7: memref<2x4x128xf32, #tpu.memory_space<vmem>>) attributes {dimension_semantics = [#tpu.dimension_semantics<parallel>, #tpu.dimension_semantics<arbitrary>], iteration_bounds = array<i64: 1, 1>, scalar_prefetch = 0 : i64, scratch_operands = 0 : i64, tpu.core_type = #tpu.core_type<tc>, window_params = [{transform_indices = @transform_0, window_bounds = array<i64: 4, 2, 128>}, {transform_indices = @transform_1, window_bounds = array<i64: 4, 2, 128>}, {transform_indices = @transform_2, window_bounds = array<i64: 4, 4, 128>}, {transform_indices = @transform_3, window_bounds = array<i64: 4, 4, 128>}, {transform_indices = @transform_4, window_bounds = array<i64: 2, 4, 128>}, {transform_indices = @transform_5, window_bounds = array<i64: 2, 4, 128>}]} {
    %cst = arith.constant 0.000000e+00 : f32
    %0 = vector.broadcast %cst : f32 to vector<2x4x128xf32>
    %cst_0 = arith.constant 0.000000e+00 : f32
    %1 = vector.broadcast %cst_0 : f32 to vector<2x4x128xf32>
    %c0 = arith.constant 0 : index
    %c0_1 = arith.constant 0 : index
    %c0_2 = arith.constant 0 : index
    %2 = vector.load %arg2[%c0, %c0_1, %c0_2] : memref<4x2x128xf32, #tpu.memory_space<vmem>>, vector<1x2x128xf32>
    %3 = vector.shape_cast %2 : vector<1x2x128xf32> to vector<2x128xf32>
    %4 = vector.shape_cast %3 : vector<2x128xf32> to vector<2x1x128xf32>
    %c0_3 = arith.constant 0 : index
    %c0_4 = arith.constant 0 : index
    %c0_5 = arith.constant 0 : index
    %5 = vector.load %arg3[%c0_3, %c0_4, %c0_5] : memref<4x2x128xf32, #tpu.memory_space<vmem>>, vector<1x2x128xf32>
    %6 = vector.shape_cast %5 : vector<1x2x128xf32> to vector<2x128xf32>
    %7 = vector.shape_cast %6 : vector<2x128xf32> to vector<2x1x128xf32>
    %c0_6 = arith.constant 0 : index
    %c0_7 = arith.constant 0 : index
    %c0_8 = arith.constant 0 : index
    %8 = vector.load %arg4[%c0_6, %c0_7, %c0_8] : memref<4x4x128xf32, #tpu.memory_space<vmem>>, vector<1x4x128xf32>
    %9 = vector.shape_cast %8 : vector<1x4x128xf32> to vector<4x128xf32>
    %10 = vector.shape_cast %9 : vector<4x128xf32> to vector<1x4x128xf32>
    %c0_9 = arith.constant 0 : index
    %c0_10 = arith.constant 0 : index
    %c0_11 = arith.constant 0 : index
    %11 = vector.load %arg5[%c0_9, %c0_10, %c0_11] : memref<4x4x128xf32, #tpu.memory_space<vmem>>, vector<1x4x128xf32>
    %12 = vector.shape_cast %11 : vector<1x4x128xf32> to vector<4x128xf32>
    %13 = vector.shape_cast %12 : vector<4x128xf32> to vector<1x4x128xf32>
    %14 = vector.broadcast %4 : vector<2x1x128xf32> to vector<2x4x128xf32>
    %15 = vector.broadcast %10 : vector<1x4x128xf32> to vector<2x4x128xf32>
    %16 = arith.mulf %14, %15 : vector<2x4x128xf32>
    %17 = vector.broadcast %7 : vector<2x1x128xf32> to vector<2x4x128xf32>
    %18 = vector.broadcast %13 : vector<1x4x128xf32> to vector<2x4x128xf32>
    %19 = arith.mulf %17, %18 : vector<2x4x128xf32>
    %20 = arith.subf %16, %19 : vector<2x4x128xf32>
    %21 = arith.addf %0, %20 : vector<2x4x128xf32>
    %22 = vector.broadcast %4 : vector<2x1x128xf32> to vector<2x4x128xf32>
    %23 = vector.broadcast %13 : vector<1x4x128xf32> to vector<2x4x128xf32>
    %24 = arith.mulf %22, %23 : vector<2x4x128xf32>
    %25 = vector.broadcast %7 : vector<2x1x128xf32> to vector<2x4x128xf32>
    %26 = vector.broadcast %10 : vector<1x4x128xf32> to vector<2x4x128xf32>
    %27 = arith.mulf %25, %26 : vector<2x4x128xf32>
    %28 = arith.addf %24, %27 : vector<2x4x128xf32>
    %29 = arith.addf %1, %28 : vector<2x4x128xf32>
    %c1 = arith.constant 1 : index
    %c0_12 = arith.constant 0 : index
    %c0_13 = arith.constant 0 : index
    %30 = vector.load %arg2[%c1, %c0_12, %c0_13] : memref<4x2x128xf32, #tpu.memory_space<vmem>>, vector<1x2x128xf32>
    %31 = vector.shape_cast %30 : vector<1x2x128xf32> to vector<2x128xf32>
    %32 = vector.shape_cast %31 : vector<2x128xf32> to vector<2x1x128xf32>
    %c1_14 = arith.constant 1 : index
    %c0_15 = arith.constant 0 : index
    %c0_16 = arith.constant 0 : index
    %33 = vector.load %arg3[%c1_14, %c0_15, %c0_16] : memref<4x2x128xf32, #tpu.memory_space<vmem>>, vector<1x2x128xf32>
    %34 = vector.shape_cast %33 : vector<1x2x128xf32> to vector<2x128xf32>
    %35 = vector.shape_cast %34 : vector<2x128xf32> to vector<2x1x128xf32>
    %c1_17 = arith.constant 1 : index
    %c0_18 = arith.constant 0 : index
    %c0_19 = arith.constant 0 : index
    %36 = vector.load %arg4[%c1_17, %c0_18, %c0_19] : memref<4x4x128xf32, #tpu.memory_space<vmem>>, vector<1x4x128xf32>
    %37 = vector.shape_cast %36 : vector<1x4x128xf32> to vector<4x128xf32>
    %38 = vector.shape_cast %37 : vector<4x128xf32> to vector<1x4x128xf32>
    %c1_20 = arith.constant 1 : index
    %c0_21 = arith.constant 0 : index
    %c0_22 = arith.constant 0 : index
    %39 = vector.load %arg5[%c1_20, %c0_21, %c0_22] : memref<4x4x128xf32, #tpu.memory_space<vmem>>, vector<1x4x128xf32>
    %40 = vector.shape_cast %39 : vector<1x4x128xf32> to vector<4x128xf32>
    %41 = vector.shape_cast %40 : vector<4x128xf32> to vector<1x4x128xf32>
    %42 = vector.broadcast %32 : vector<2x1x128xf32> to vector<2x4x128xf32>
    %43 = vector.broadcast %38 : vector<1x4x128xf32> to vector<2x4x128xf32>
    %44 = arith.mulf %42, %43 : vector<2x4x128xf32>
    %45 = vector.broadcast %35 : vector<2x1x128xf32> to vector<2x4x128xf32>
    %46 = vector.broadcast %41 : vector<1x4x128xf32> to vector<2x4x128xf32>
    %47 = arith.mulf %45, %46 : vector<2x4x128xf32>
    %48 = arith.subf %44, %47 : vector<2x4x128xf32>
    %49 = arith.addf %21, %48 : vector<2x4x128xf32>
    %50 = vector.broadcast %32 : vector<2x1x128xf32> to vector<2x4x128xf32>
    %51 = vector.broadcast %41 : vector<1x4x128xf32> to vector<2x4x128xf32>
    %52 = arith.mulf %50, %51 : vector<2x4x128xf32>
    %53 = vector.broadcast %35 : vector<2x1x128xf32> to vector<2x4x128xf32>
    %54 = vector.broadcast %38 : vector<1x4x128xf32> to vector<2x4x128xf32>
    %55 = arith.mulf %53, %54 : vector<2x4x128xf32>
    %56 = arith.addf %52, %55 : vector<2x4x128xf32>
    %57 = arith.addf %29, %56 : vector<2x4x128xf32>
    %c2 = arith.constant 2 : index
    %c0_23 = arith.constant 0 : index
    %c0_24 = arith.constant 0 : index
    %58 = vector.load %arg2[%c2, %c0_23, %c0_24] : memref<4x2x128xf32, #tpu.memory_space<vmem>>, vector<1x2x128xf32>
    %59 = vector.shape_cast %58 : vector<1x2x128xf32> to vector<2x128xf32>
    %60 = vector.shape_cast %59 : vector<2x128xf32> to vector<2x1x128xf32>
    %c2_25 = arith.constant 2 : index
    %c0_26 = arith.constant 0 : index
    %c0_27 = arith.constant 0 : index
    %61 = vector.load %arg3[%c2_25, %c0_26, %c0_27] : memref<4x2x128xf32, #tpu.memory_space<vmem>>, vector<1x2x128xf32>
    %62 = vector.shape_cast %61 : vector<1x2x128xf32> to vector<2x128xf32>
    %63 = vector.shape_cast %62 : vector<2x128xf32> to vector<2x1x128xf32>
    %c2_28 = arith.constant 2 : index
    %c0_29 = arith.constant 0 : index
    %c0_30 = arith.constant 0 : index
    %64 = vector.load %arg4[%c2_28, %c0_29, %c0_30] : memref<4x4x128xf32, #tpu.memory_space<vmem>>, vector<1x4x128xf32>
    %65 = vector.shape_cast %64 : vector<1x4x128xf32> to vector<4x128xf32>
    %66 = vector.shape_cast %65 : vector<4x128xf32> to vector<1x4x128xf32>
    %c2_31 = arith.constant 2 : index
    %c0_32 = arith.constant 0 : index
    %c0_33 = arith.constant 0 : index
    %67 = vector.load %arg5[%c2_31, %c0_32, %c0_33] : memref<4x4x128xf32, #tpu.memory_space<vmem>>, vector<1x4x128xf32>
    %68 = vector.shape_cast %67 : vector<1x4x128xf32> to vector<4x128xf32>
    %69 = vector.shape_cast %68 : vector<4x128xf32> to vector<1x4x128xf32>
    %70 = vector.broadcast %60 : vector<2x1x128xf32> to vector<2x4x128xf32>
    %71 = vector.broadcast %66 : vector<1x4x128xf32> to vector<2x4x128xf32>
    %72 = arith.mulf %70, %71 : vector<2x4x128xf32>
    %73 = vector.broadcast %63 : vector<2x1x128xf32> to vector<2x4x128xf32>
    %74 = vector.broadcast %69 : vector<1x4x128xf32> to vector<2x4x128xf32>
    %75 = arith.mulf %73, %74 : vector<2x4x128xf32>
    %76 = arith.subf %72, %75 : vector<2x4x128xf32>
    %77 = arith.addf %49, %76 : vector<2x4x128xf32>
    %78 = vector.broadcast %60 : vector<2x1x128xf32> to vector<2x4x128xf32>
    %79 = vector.broadcast %69 : vector<1x4x128xf32> to vector<2x4x128xf32>
    %80 = arith.mulf %78, %79 : vector<2x4x128xf32>
    %81 = vector.broadcast %63 : vector<2x1x128xf32> to vector<2x4x128xf32>
    %82 = vector.broadcast %66 : vector<1x4x128xf32> to vector<2x4x128xf32>
    %83 = arith.mulf %81, %82 : vector<2x4x128xf32>
    %84 = arith.addf %80, %83 : vector<2x4x128xf32>
    %85 = arith.addf %57, %84 : vector<2x4x128xf32>
    %c3 = arith.constant 3 : index
    %c0_34 = arith.constant 0 : index
    %c0_35 = arith.constant 0 : index
    %86 = vector.load %arg2[%c3, %c0_34, %c0_35] : memref<4x2x128xf32, #tpu.memory_space<vmem>>, vector<1x2x128xf32>
    %87 = vector.shape_cast %86 : vector<1x2x128xf32> to vector<2x128xf32>
    %88 = vector.shape_cast %87 : vector<2x128xf32> to vector<2x1x128xf32>
    %c3_36 = arith.constant 3 : index
    %c0_37 = arith.constant 0 : index
    %c0_38 = arith.constant 0 : index
    %89 = vector.load %arg3[%c3_36, %c0_37, %c0_38] : memref<4x2x128xf32, #tpu.memory_space<vmem>>, vector<1x2x128xf32>
    %90 = vector.shape_cast %89 : vector<1x2x128xf32> to vector<2x128xf32>
    %91 = vector.shape_cast %90 : vector<2x128xf32> to vector<2x1x128xf32>
    %c3_39 = arith.constant 3 : index
    %c0_40 = arith.constant 0 : index
    %c0_41 = arith.constant 0 : index
    %92 = vector.load %arg4[%c3_39, %c0_40, %c0_41] : memref<4x4x128xf32, #tpu.memory_space<vmem>>, vector<1x4x128xf32>
    %93 = vector.shape_cast %92 : vector<1x4x128xf32> to vector<4x128xf32>
    %94 = vector.shape_cast %93 : vector<4x128xf32> to vector<1x4x128xf32>
    %c3_42 = arith.constant 3 : index
    %c0_43 = arith.constant 0 : index
    %c0_44 = arith.constant 0 : index
    %95 = vector.load %arg5[%c3_42, %c0_43, %c0_44] : memref<4x4x128xf32, #tpu.memory_space<vmem>>, vector<1x4x128xf32>
    %96 = vector.shape_cast %95 : vector<1x4x128xf32> to vector<4x128xf32>
    %97 = vector.shape_cast %96 : vector<4x128xf32> to vector<1x4x128xf32>
    %98 = vector.broadcast %88 : vector<2x1x128xf32> to vector<2x4x128xf32>
    %99 = vector.broadcast %94 : vector<1x4x128xf32> to vector<2x4x128xf32>
    %100 = arith.mulf %98, %99 : vector<2x4x128xf32>
    %101 = vector.broadcast %91 : vector<2x1x128xf32> to vector<2x4x128xf32>
    %102 = vector.broadcast %97 : vector<1x4x128xf32> to vector<2x4x128xf32>
    %103 = arith.mulf %101, %102 : vector<2x4x128xf32>
    %104 = arith.subf %100, %103 : vector<2x4x128xf32>
    %105 = arith.addf %77, %104 : vector<2x4x128xf32>
    %106 = vector.broadcast %88 : vector<2x1x128xf32> to vector<2x4x128xf32>
    %107 = vector.broadcast %97 : vector<1x4x128xf32> to vector<2x4x128xf32>
    %108 = arith.mulf %106, %107 : vector<2x4x128xf32>
    %109 = vector.broadcast %91 : vector<2x1x128xf32> to vector<2x4x128xf32>
    %110 = vector.broadcast %94 : vector<1x4x128xf32> to vector<2x4x128xf32>
    %111 = arith.mulf %109, %110 : vector<2x4x128xf32>
    %112 = arith.addf %108, %111 : vector<2x4x128xf32>
    %113 = arith.addf %85, %112 : vector<2x4x128xf32>
    %c0_i32 = arith.constant 0 : i32
    %114 = arith.cmpi eq, %arg1, %c0_i32 : i32
    %115 = arith.extui %114 : i1 to i32
    %c0_i32_45 = arith.constant 0 : i32
    %116 = arith.cmpi ne, %115, %c0_i32_45 : i32
    scf.if %116 {
      %c0_48 = arith.constant 0 : index
      %c0_49 = arith.constant 0 : index
      %c0_50 = arith.constant 0 : index
      %120 = vector.load %arg6[%c0_48, %c0_49, %c0_50] : memref<2x4x128xf32, #tpu.memory_space<vmem>>, vector<2x4x128xf32>
      tpu.vector_store %arg6[%c0_48, %c0_49, %c0_50], %105 {strides = array<i32>} : memref<2x4x128xf32, #tpu.memory_space<vmem>>, vector<2x4x128xf32>,
      %c0_51 = arith.constant 0 : index
      %c0_52 = arith.constant 0 : index
      %c0_53 = arith.constant 0 : index
      %121 = vector.load %arg7[%c0_51, %c0_52, %c0_53] : memref<2x4x128xf32, #tpu.memory_space<vmem>>, vector<2x4x128xf32>
      tpu.vector_store %arg7[%c0_51, %c0_52, %c0_53], %113 {strides = array<i32>} : memref<2x4x128xf32, #tpu.memory_space<vmem>>, vector<2x4x128xf32>,
    } else {
    }
    %c0_i32_46 = arith.constant 0 : i32
    %117 = arith.cmpi sgt, %arg1, %c0_i32_46 : i32
    %118 = arith.extui %117 : i1 to i32
    %c0_i32_47 = arith.constant 0 : i32
    %119 = arith.cmpi ne, %118, %c0_i32_47 : i32
    scf.if %119 {
      %c0_48 = arith.constant 0 : index
      %c0_49 = arith.constant 0 : index
      %c0_50 = arith.constant 0 : index
      %120 = vector.load %arg6[%c0_48, %c0_49, %c0_50] : memref<2x4x128xf32, #tpu.memory_space<vmem>>, vector<2x4x128xf32>
      %121 = arith.addf %120, %105 : vector<2x4x128xf32>
      %c0_51 = arith.constant 0 : index
      %c0_52 = arith.constant 0 : index
      %c0_53 = arith.constant 0 : index
      %122 = vector.load %arg6[%c0_51, %c0_52, %c0_53] : memref<2x4x128xf32, #tpu.memory_space<vmem>>, vector<2x4x128xf32>
      tpu.vector_store %arg6[%c0_51, %c0_52, %c0_53], %121 {strides = array<i32>} : memref<2x4x128xf32, #tpu.memory_space<vmem>>, vector<2x4x128xf32>,
      %c0_54 = arith.constant 0 : index
      %c0_55 = arith.constant 0 : index
      %c0_56 = arith.constant 0 : index
      %123 = vector.load %arg7[%c0_54, %c0_55, %c0_56] : memref<2x4x128xf32, #tpu.memory_space<vmem>>, vector<2x4x128xf32>
      %124 = arith.addf %123, %113 : vector<2x4x128xf32>
      %c0_57 = arith.constant 0 : index
      %c0_58 = arith.constant 0 : index
      %c0_59 = arith.constant 0 : index
      %125 = vector.load %arg7[%c0_57, %c0_58, %c0_59] : memref<2x4x128xf32, #tpu.memory_space<vmem>>, vector<2x4x128xf32>
      tpu.vector_store %arg7[%c0_57, %c0_58, %c0_59], %124 {strides = array<i32>} : memref<2x4x128xf32, #tpu.memory_space<vmem>>, vector<2x4x128xf32>,
    } else {
    }
    return
  }
  func.func @transform_0(%arg0: i32, %arg1: i32) -> (i32, i32, i32) {
    %c0_i32 = arith.constant 0 : i32
    %c0_i32_0 = arith.constant 0 : i32
    return %arg1, %c0_i32, %arg0 : i32, i32, i32
  }
  func.func @transform_1(%arg0: i32, %arg1: i32) -> (i32, i32, i32) {
    %c0_i32 = arith.constant 0 : i32
    %c0_i32_0 = arith.constant 0 : i32
    return %arg1, %c0_i32, %arg0 : i32, i32, i32
  }
  func.func @transform_2(%arg0: i32, %arg1: i32) -> (i32, i32, i32) {
    %c0_i32 = arith.constant 0 : i32
    %c0_i32_0 = arith.constant 0 : i32
    return %arg1, %c0_i32, %arg0 : i32, i32, i32
  }
  func.func @transform_3(%arg0: i32, %arg1: i32) -> (i32, i32, i32) {
    %c0_i32 = arith.constant 0 : i32
    %c0_i32_0 = arith.constant 0 : i32
    return %arg1, %c0_i32, %arg0 : i32, i32, i32
  }
  func.func @transform_4(%arg0: i32, %arg1: i32) -> (i32, i32, i32) {
    %c0_i32 = arith.constant 0 : i32
    %c0_i32_0 = arith.constant 0 : i32
    %c0_i32_1 = arith.constant 0 : i32
    return %c0_i32, %c0_i32_0, %arg0 : i32, i32, i32
  }
  func.func @transform_5(%arg0: i32, %arg1: i32) -> (i32, i32, i32) {
    %c0_i32 = arith.constant 0 : i32
    %c0_i32_0 = arith.constant 0 : i32
    %c0_i32_1 = arith.constant 0 : i32
    return %c0_i32, %c0_i32_0, %arg0 : i32, i32, i32
  }
}

module attributes {stable_mosaic.version = 11 : i64} {
  func.func @_fused_skip_gelu_kernel(%arg0: i32, %arg1: i32, %arg2: memref<4x4xf32, #tpu.memory_space<vmem>>, %arg3: memref<4x1xf32, #tpu.memory_space<vmem>>, %arg4: memref<1x4x256xf32, #tpu.memory_space<vmem>>, %arg5: memref<1x4x256xf32, #tpu.memory_space<vmem>>, %arg6: memref<1x4x256xf32, #tpu.memory_space<vmem>>) attributes {dimension_semantics = [#tpu.dimension_semantics<parallel>, #tpu.dimension_semantics<parallel>], iteration_bounds = array<i64: 2, 1>, scalar_prefetch = 0 : i64, scratch_operands = 0 : i64, tpu.core_type = #tpu.core_type<tc>, window_params = [{pipeline_mode = #tpu.pipeline_mode<synchronous>, transform_indices = @transform_0, window_bounds = array<i64: 4, 4>}, {pipeline_mode = #tpu.pipeline_mode<synchronous>, transform_indices = @transform_1, window_bounds = array<i64: 4, 1>}, {transform_indices = @transform_2, window_bounds = array<i64: 1, 4, 256>}, {transform_indices = @transform_3, window_bounds = array<i64: 1, 4, 256>}, {transform_indices = @transform_4, window_bounds = array<i64: 1, 4, 256>}]} {
    %c0 = arith.constant 0 : index
    %c0_0 = arith.constant 0 : index
    %0 = vector.load %arg2[%c0, %c0_0] : memref<4x4xf32, #tpu.memory_space<vmem>>, vector<4x4xf32>
    %c0_1 = arith.constant 0 : index
    %c0_2 = arith.constant 0 : index
    %c0_3 = arith.constant 0 : index
    %1 = vector.load %arg4[%c0_1, %c0_2, %c0_3] : memref<1x4x256xf32, #tpu.memory_space<vmem>>, vector<1x4x256xf32>
    %2 = vector.shape_cast %1 : vector<1x4x256xf32> to vector<4x256xf32>
    %cst = arith.constant dense<0.000000e+00> : vector<4x256xf32>
    %3 = tpu.matmul %0, %2, %cst {dimension_numbers = #tpu.dot_dimension_numbers<[1], [0], [0], [1], [0, 0, 1, 1], [], []>} : vector<4x4xf32>, vector<4x256xf32>, vector<4x256xf32> -> vector<4x256xf32>
    %c0_4 = arith.constant 0 : index
    %c0_5 = arith.constant 0 : index
    %4 = vector.load %arg3[%c0_4, %c0_5] : memref<4x1xf32, #tpu.memory_space<vmem>>, vector<4x1xf32>
    %5 = vector.broadcast %4 : vector<4x1xf32> to vector<4x256xf32>
    %6 = arith.addf %3, %5 : vector<4x256xf32>
    %c0_6 = arith.constant 0 : index
    %c0_7 = arith.constant 0 : index
    %c0_8 = arith.constant 0 : index
    %7 = vector.load %arg5[%c0_6, %c0_7, %c0_8] : memref<1x4x256xf32, #tpu.memory_space<vmem>>, vector<1x4x256xf32>
    %8 = vector.shape_cast %7 : vector<1x4x256xf32> to vector<4x256xf32>
    %9 = arith.addf %6, %8 : vector<4x256xf32>
    %cst_9 = arith.constant 5.000000e-01 : f32
    %10 = vector.broadcast %cst_9 : f32 to vector<4x256xf32>
    %11 = arith.mulf %10, %9 : vector<4x256xf32>
    %cst_10 = arith.constant 0.707106769 : f32
    %12 = vector.broadcast %cst_10 : f32 to vector<4x256xf32>
    %13 = arith.mulf %9, %12 : vector<4x256xf32>
    %14 = math.erf %13 : vector<4x256xf32>
    %cst_11 = arith.constant 1.000000e+00 : f32
    %15 = vector.broadcast %cst_11 : f32 to vector<4x256xf32>
    %16 = arith.addf %15, %14 : vector<4x256xf32>
    %17 = arith.mulf %11, %16 : vector<4x256xf32>
    %18 = arith.addf %17, %2 : vector<4x256xf32>
    %c0_12 = arith.constant 0 : index
    %c0_13 = arith.constant 0 : index
    %c0_14 = arith.constant 0 : index
    %19 = vector.load %arg6[%c0_12, %c0_13, %c0_14] : memref<1x4x256xf32, #tpu.memory_space<vmem>>, vector<1x4x256xf32>
    %20 = vector.shape_cast %19 : vector<1x4x256xf32> to vector<4x256xf32>
    %21 = vector.shape_cast %18 : vector<4x256xf32> to vector<1x4x256xf32>
    tpu.vector_store %arg6[%c0_12, %c0_13, %c0_14], %21 {strides = array<i32>} : memref<1x4x256xf32, #tpu.memory_space<vmem>>, vector<1x4x256xf32>,
    return
  }
  func.func @transform_0(%arg0: i32, %arg1: i32) -> (i32, i32) {
    %c0_i32 = arith.constant 0 : i32
    %c0_i32_0 = arith.constant 0 : i32
    %c0_i32_1 = arith.constant 0 : i32
    return %c0_i32, %c0_i32_0 : i32, i32
  }
  func.func @transform_1(%arg0: i32, %arg1: i32) -> (i32, i32) {
    %c0_i32 = arith.constant 0 : i32
    %c0_i32_0 = arith.constant 0 : i32
    %c0_i32_1 = arith.constant 0 : i32
    return %c0_i32, %c0_i32_0 : i32, i32
  }
  func.func @transform_2(%arg0: i32, %arg1: i32) -> (i32, i32, i32) {
    %c0_i32 = arith.constant 0 : i32
    %c0_i32_0 = arith.constant 0 : i32
    return %arg0, %c0_i32, %arg1 : i32, i32, i32
  }
  func.func @transform_3(%arg0: i32, %arg1: i32) -> (i32, i32, i32) {
    %c0_i32 = arith.constant 0 : i32
    %c0_i32_0 = arith.constant 0 : i32
    return %arg0, %c0_i32, %arg1 : i32, i32, i32
  }
  func.func @transform_4(%arg0: i32, %arg1: i32) -> (i32, i32, i32) {
    %c0_i32 = arith.constant 0 : i32
    %c0_i32_0 = arith.constant 0 : i32
    return %arg0, %c0_i32, %arg1 : i32, i32, i32
  }
}

</mosaic_0001>

<llo_original>
// kernel: fourier_layer2d.2
$region0: #{fourier_layer2d.2}
  #allocation0 [shape = 'u32[]', space=smem, size = 0x4, offset = 0x4, fixed_abs, tag = 'smem constant byte address 0x4 - core index']
  #allocation1 [shape = 'u32[72,128]{1,0:T(1,128)}', space=vmem, size = 0x9000, scoped, tag = 'internal scratch']
  %s0 = inlined_call_operand.vmem [shape: f32[4,2,128], index: 0, kind: input, shape index: {}]
  %s1 = inlined_call_operand.vmem [shape: f32[4,2,128], index: 1, kind: input, shape index: {}]
  %s2 = inlined_call_operand.vmem [shape: f32[4,4,128], index: 2, kind: input, shape index: {}]
  %s3 = inlined_call_operand.vmem [shape: f32[4,4,128], index: 3, kind: input, shape index: {}]
  %s4 = inlined_call_operand.vmem [shape: f32[2,4,128], index: 4, kind: output, shape index: {0}]
  %s5 = inlined_call_operand.vmem [shape: f32[2,4,128], index: 5, kind: output, shape index: {1}]
  %6 = xla_tuple %s4, %s5
  %s7 = sld [smem:[#allocation0]]
  $region42: #{fourier_layer2d.2} parent=0
    _
  %s9 = ssub.s32 1, %s7
  %s10 = scalar_select 0, %s9, %s7
  // Predicated region
  $region2: #{fourier_layer2d.2} parent=0 // pred_check
    _
  $region3: #{fourier_layer2d.2} parent=0 // pred_check_branch
    %12 = sbr.rel (0) target = $region5
  $region4: #{fourier_layer2d.2} parent=0 // pred_region
    _
  $region5: #{fourier_layer2d.2} parent=0 // pred_fallthru
    _
  // Predicated region
  $region6: #{fourier_layer2d.2} parent=0 // pred_check
    _
  $region7: #{fourier_layer2d.2} parent=0 // pred_check_branch
    %14 = sbr.rel (0) target = $region9
  $region8: #{fourier_layer2d.2} parent=0 // pred_region
    _
  $region9: #{fourier_layer2d.2} parent=0 // pred_fallthru
    _
  // Predicated region
  $region10: #{fourier_layer2d.2} parent=0 // pred_check
    _
  $region11: #{fourier_layer2d.2} parent=0 // pred_check_branch
    %16 = sbr.rel (0) target = $region13
  $region12: #{fourier_layer2d.2} parent=0 // pred_region
    _
  $region13: #{fourier_layer2d.2} parent=0 // pred_fallthru
    _
  // Predicated region
  $region14: #{fourier_layer2d.2} parent=0 // pred_check
    _
  $region15: #{fourier_layer2d.2} parent=0 // pred_check_branch
    %18 = sbr.rel (0) target = $region17
  $region16: #{fourier_layer2d.2} parent=0 // pred_region
    _
  $region17: #{fourier_layer2d.2} parent=0 // pred_fallthru
    _
  %v19 = vld [vmem:[%s0] sm:$0x3]
  %v21 = vrot.slane %v19, 1
  %v22 = vld [vmem:[%s1] sm:$0x3]
  %v24 = vrot.slane %v22, 1
  %v25 = vld [vmem:[%s2] sm:$0xf]
  %v26 = vld [vmem:[%s3] sm:$0xf]
  %v27 = vperm.slane %v19, 0
  %v28 = vperm.slane %v21, 0
  %v31 = vmul.f32 %v27, %v25
  %v32 = vmul.f32 %v28, %v25
  %v33 = vperm.slane %v22, 0
  %v34 = vperm.slane %v24, 0
  %v37 = vmul.f32 %v33, %v26
  %v38 = vmul.f32 %v34, %v26
  %v39 = vsub.f32 %v31, %v37
  %v40 = vsub.f32 %v32, %v38
  %v41 = vadd.f32 %v39, 0.0
  %v42 = vadd.f32 %v40, 0.0
  %v43 = vmul.f32 %v27, %v26
  %v44 = vmul.f32 %v28, %v26
  %v45 = vmul.f32 %v33, %v25
  %v46 = vmul.f32 %v34, %v25
  %v47 = vadd.f32 %v43, %v45
  %v48 = vadd.f32 %v44, %v46
  %v49 = vadd.f32 %v47, 0.0
  %v50 = vadd.f32 %v48, 0.0
  %s51 = scalar_lea.vmem %s0, 2
  %v52 = vld [vmem:[%s51] sm:$0x3]
  %v54 = vrot.slane %v52, 1
  %s55 = scalar_lea.vmem %s1, 2
  %v56 = vld [vmem:[%s55] sm:$0x3]
  %v58 = vrot.slane %v56, 1
  %s59 = scalar_lea.vmem %s2, 4
  %v60 = vld [vmem:[%s59] sm:$0xf]
  %s61 = scalar_lea.vmem %s3, 4
  %v62 = vld [vmem:[%s61] sm:$0xf]
  %v63 = vperm.slane %v52, 0
  %v64 = vperm.slane %v54, 0
  %v67 = vmul.f32 %v63, %v60
  %v68 = vmul.f32 %v64, %v60
  %v69 = vperm.slane %v56, 0
  %v70 = vperm.slane %v58, 0
  %v73 = vmul.f32 %v69, %v62
  %v74 = vmul.f32 %v70, %v62
  %v75 = vsub.f32 %v67, %v73
  %v76 = vsub.f32 %v68, %v74
  %v77 = vadd.f32 %v41, %v75
  %v78 = vadd.f32 %v42, %v76
  %v79 = vmul.f32 %v63, %v62
  %v80 = vmul.f32 %v64, %v62
  %v81 = vmul.f32 %v69, %v60
  %v82 = vmul.f32 %v70, %v60
  %v83 = vadd.f32 %v79, %v81
  %v84 = vadd.f32 %v80, %v82
  %v85 = vadd.f32 %v49, %v83
  %v86 = vadd.f32 %v50, %v84
  %s87 = scalar_lea.vmem %s0, 4
  %v88 = vld [vmem:[%s87] sm:$0x3]
  %v90 = vrot.slane %v88, 1
  %s91 = scalar_lea.vmem %s1, 4
  %v92 = vld [vmem:[%s91] sm:$0x3]
  %v94 = vrot.slane %v92, 1
  %s95 = scalar_lea.vmem %s2, 8
  %v96 = vld [vmem:[%s95] sm:$0xf]
  %s97 = scalar_lea.vmem %s3, 8
  %v98 = vld [vmem:[%s97] sm:$0xf]
  %v99 = vperm.slane %v88, 0
  %v100 = vperm.slane %v90, 0
  %v103 = vmul.f32 %v99, %v96
  %v104 = vmul.f32 %v100, %v96
  %v105 = vperm.slane %v92, 0
  %v106 = vperm.slane %v94, 0
  %v109 = vmul.f32 %v105, %v98
  %v110 = vmul.f32 %v106, %v98
  %v111 = vsub.f32 %v103, %v109
  %v112 = vsub.f32 %v104, %v110
  %v113 = vadd.f32 %v77, %v111
  %v114 = vadd.f32 %v78, %v112
  %v115 = vmul.f32 %v99, %v98
  %v116 = vmul.f32 %v100, %v98
  %v117 = vmul.f32 %v105, %v96
  %v118 = vmul.f32 %v106, %v96
  %v119 = vadd.f32 %v115, %v117
  %v120 = vadd.f32 %v116, %v118
  %v121 = vadd.f32 %v85, %v119
  %v122 = vadd.f32 %v86, %v120
  %s123 = scalar_lea.vmem %s0, 6
  %v124 = vld [vmem:[%s123] sm:$0x3]
  %v126 = vrot.slane %v124, 1
  %s127 = scalar_lea.vmem %s1, 6
  %v128 = vld [vmem:[%s127] sm:$0x3]
  %v130 = vrot.slane %v128, 1
  %s131 = scalar_lea.vmem %s2, 12
  %v132 = vld [vmem:[%s131] sm:$0xf]
  %s133 = scalar_lea.vmem %s3, 12
  %v134 = vld [vmem:[%s133] sm:$0xf]
  %v135 = vperm.slane %v124, 0
  %v136 = vperm.slane %v126, 0
  %v139 = vmul.f32 %v135, %v132
  %v140 = vmul.f32 %v136, %v132
  %v141 = vperm.slane %v128, 0
  %v142 = vperm.slane %v130, 0
  %v145 = vmul.f32 %v141, %v134
  %v146 = vmul.f32 %v142, %v134
  %v147 = vsub.f32 %v139, %v145
  %v148 = vsub.f32 %v140, %v146
  %v149 = vadd.f32 %v113, %v147
  %v150 = vadd.f32 %v114, %v148
  %v151 = vmul.f32 %v135, %v134
  %v152 = vmul.f32 %v136, %v134
  %v153 = vmul.f32 %v141, %v132
  %v154 = vmul.f32 %v142, %v132
  %v155 = vadd.f32 %v151, %v153
  %v156 = vadd.f32 %v152, %v154
  %v157 = vadd.f32 %v121, %v155
  %v158 = vadd.f32 %v122, %v156
  %p159 = scmp.eq.s32.totalorder 0, 0
  // Predicated region
  $region18: #{fourier_layer2d.2} parent=0 // pred_check
    %p160 = pneg %p159
  $region19: #{fourier_layer2d.2} parent=0 // pred_check_branch
    %162 = sbr.rel (%p160) target = $region21
  $region20: #{fourier_layer2d.2} parent=0 // pred_region
    %163 = vst [vmem:[%s4] sm:$0xf] %v149
    %164 = vst [vmem:[%s4 + $0x4] sm:$0xf] %v150
    %165 = vst [vmem:[%s5] sm:$0xf] %v157
    %166 = vst [vmem:[%s5 + $0x4] sm:$0xf] %v158
  $region21: #{fourier_layer2d.2} parent=0 // pred_fallthru
    _
  %p167 = scmp.gt.s32.totalorder 0, 0
  // Predicated region
  $region22: #{fourier_layer2d.2} parent=0 // pred_check
    %p168 = pneg %p167
  $region23: #{fourier_layer2d.2} parent=0 // pred_check_branch
    %170 = sbr.rel (%p168) target = $region25
  $region24: #{fourier_layer2d.2} parent=0 // pred_region
    %v171 = vld [vmem:[%s4] sm:$0xf]
    %v172 = vld [vmem:[%s4 + $0x4] sm:$0xf]
    %v173 = vadd.f32 %v171, %v149
    %v174 = vadd.f32 %v172, %v150
    %175 = vst [vmem:[%s4] sm:$0xf] %v173
    %176 = vst [vmem:[%s4 + $0x4] sm:$0xf] %v174
    %v177 = vld [vmem:[%s5] sm:$0xf]
    %v178 = vld [vmem:[%s5 + $0x4] sm:$0xf]
    %v179 = vadd.f32 %v177, %v157
    %v180 = vadd.f32 %v178, %v158
    %181 = vst [vmem:[%s5] sm:$0xf] %v179
    %182 = vst [vmem:[%s5 + $0x4] sm:$0xf] %v180
  $region25: #{fourier_layer2d.2} parent=0 // pred_fallthru
    _
  // Predicated region
  $region26: #{fourier_layer2d.2} parent=0 // pred_check
    _
  $region27: #{fourier_layer2d.2} parent=0 // pred_check_branch
    %184 = sbr.rel (0) target = $region29
  $region28: #{fourier_layer2d.2} parent=0 // pred_region
    _
  $region29: #{fourier_layer2d.2} parent=0 // pred_fallthru
    _
  // Predicated region
  $region30: #{fourier_layer2d.2} parent=0 // pred_check
    _
  $region31: #{fourier_layer2d.2} parent=0 // pred_check_branch
    %186 = sbr.rel (0) target = $region33
  $region32: #{fourier_layer2d.2} parent=0 // pred_region
    _
  $region33: #{fourier_layer2d.2} parent=0 // pred_fallthru
    _
  // Predicated region
  $region34: #{fourier_layer2d.2} parent=0 // pred_check
    _
  $region35: #{fourier_layer2d.2} parent=0 // pred_check_branch
    %188 = sbr.rel (0) target = $region37
  $region36: #{fourier_layer2d.2} parent=0 // pred_region
    _
  $region37: #{fourier_layer2d.2} parent=0 // pred_fallthru
    _
  // Predicated region
  $region38: #{fourier_layer2d.2} parent=0 // pred_check
    _
  $region39: #{fourier_layer2d.2} parent=0 // pred_check_branch
    %190 = sbr.rel (0) target = $region41
  $region40: #{fourier_layer2d.2} parent=0 // pred_region
    _
  $region41: #{fourier_layer2d.2} parent=0 // pred_fallthru
    _

// kernel: reverse.0
$region0: #{reverse.0}
  %s0 = inlined_call_operand.vmem [shape: f32[2,4,16,7], index: 0, kind: input, shape index: {}]
  %s1 = inlined_call_operand.vmem [shape: f32[2,4,16,7], index: 1, kind: output, shape index: {}]
  $region1: #{reverse.0} parent=0
    #allocation0 [shape = 'u8[65536]{0}', space=vmem, size = 0x10000, scoped, tag = 'operand span for operand 0']
    #allocation1 [shape = 'u8[32768]{0}', space=vmem, size = 0x8000, scoped, tag = 'operand span for operand 1']
    %s2 = scalar_lea.vmem [#allocation0], 8
    // Predicated region
    $region2: #{reverse.0} parent=1 // pred_check
      _
    $region3: #{reverse.0} parent=1 // pred_check_branch
      %4 = sbr.rel (0) target = $region5
    $region4: #{reverse.0} parent=1 // pred_region
      // Predicated region
      $region6: #{reverse.0} parent=4 // pred_check
        _
      $region7: #{reverse.0} parent=4 // pred_check_branch
        %6 = sbr.rel (0) target = $region9
      $region8: #{reverse.0} parent=4 // pred_region
        // Predicated region
        $region21: #{reverse.0} parent=8 // pred_check
          _
        $region22: #{reverse.0} parent=8 // pred_check_branch
          %36 = sbr.rel (0) target = $region24
        $region23: #{reverse.0} parent=8 // pred_region
          loop: start=0, step=1, limit=1
          $region25: #{reverse.0} parent=23 // loop_pre_header
            _
          $region26: #{reverse.0} parent=23 // loop_header
            %s38 = sphi 0, %s42
            %p39 = scmp.ge.s32.totalorder %s38, 1
            %s43 = sphi %s0, %s0
            %s44 = sphi %s2, %s2
          $region27: #{reverse.0} parent=23 // loop_header_branch
            %41 = sbr.rel (%p39) target = $region31
          $region28: #{reverse.0} parent=23 // loop_body
            %v45 = vld [vmem:[%s43] sm:$0xff]
            %46 = vst [vmem:[%s44] sm:$0xff] %v45
            %v47 = vld [vmem:[%s43 + $0x8] sm:$0xff]
            %48 = vst [vmem:[%s44 + $0x10] sm:$0xff] %v47
            %v49 = vld [vmem:[%s43 + $0x10] sm:$0xff]
            %50 = vst [vmem:[%s44 + $0x20] sm:$0xff] %v49
            %v51 = vld [vmem:[%s43 + $0x18] sm:$0xff]
            %52 = vst [vmem:[%s44 + $0x30] sm:$0xff] %v51
            %v53 = vld [vmem:[%s43 + $0x20] sm:$0xff]
            %54 = vst [vmem:[%s44 + $0x40] sm:$0xff] %v53
            %v55 = vld [vmem:[%s43 + $0x28] sm:$0xff]
            %56 = vst [vmem:[%s44 + $0x50] sm:$0xff] %v55
            %v57 = vld [vmem:[%s43 + $0x30] sm:$0xff]
            %58 = vst [vmem:[%s44 + $0x60] sm:$0xff] %v57
            %v59 = vld [vmem:[%s43 + $0x38] sm:$0xff]
            %60 = vst [vmem:[%s44 + $0x70] sm:$0xff] %v59
          $region29: #{reverse.0} parent=23 // loop_footer
            %s42 = sadd.s32 1, %s38
          $region30: #{reverse.0} parent=23 // loop_footer_branch
            %37 = sbr.rel target = $region26
          $region31: #{reverse.0} parent=23 // loop_exit
            _
        $region24: #{reverse.0} parent=8 // pred_fallthru
          _
        // Predicated region
        $region32: #{reverse.0} parent=8 // pred_check
          _
        $region33: #{reverse.0} parent=8 // pred_check_branch
          %62 = sbr.rel target = $region35
        $region34: #{reverse.0} parent=8 // pred_region
          _
        $region35: #{reverse.0} parent=8 // pred_fallthru
          _
      $region9: #{reverse.0} parent=4 // pred_fallthru
        _
      // Predicated region
      $region10: #{reverse.0} parent=4 // pred_check
        _
      $region11: #{reverse.0} parent=4 // pred_check_branch
        %8 = sbr.rel target = $region13
      $region12: #{reverse.0} parent=4 // pred_region
        %s10 = ssub.s32 256, 1
        loop: start=0, step=1, limit=1
        $region14: #{reverse.0} parent=12 // loop_pre_header
          _
        $region15: #{reverse.0} parent=12 // loop_header
          %s12 = sphi 0, %s16
          %p13 = scmp.ge.s32.totalorder %s12, 1
          %s17 = sphi %s0, %s0
          %s18 = sphi %s2, %s2
        $region16: #{reverse.0} parent=12 // loop_header_branch
          %15 = sbr.rel (%p13) target = $region20
        $region17: #{reverse.0} parent=12 // loop_body
          %v19 = vld [vmem:[%s17] sm:%s10]
          %20 = vst [vmem:[%s18] sm:%s10] %v19
          %v21 = vld [vmem:[%s17 + $0x8] sm:%s10]
          %22 = vst [vmem:[%s18 + $0x10] sm:%s10] %v21
          %v23 = vld [vmem:[%s17 + $0x10] sm:%s10]
          %24 = vst [vmem:[%s18 + $0x20] sm:%s10] %v23
          %v25 = vld [vmem:[%s17 + $0x18] sm:%s10]
          %26 = vst [vmem:[%s18 + $0x30] sm:%s10] %v25
          %v27 = vld [vmem:[%s17 + $0x20] sm:%s10]
          %28 = vst [vmem:[%s18 + $0x40] sm:%s10] %v27
          %v29 = vld [vmem:[%s17 + $0x28] sm:%s10]
          %30 = vst [vmem:[%s18 + $0x50] sm:%s10] %v29
          %v31 = vld [vmem:[%s17 + $0x30] sm:%s10]
          %32 = vst [vmem:[%s18 + $0x60] sm:%s10] %v31
          %v33 = vld [vmem:[%s17 + $0x38] sm:%s10]
          %34 = vst [vmem:[%s18 + $0x70] sm:%s10] %v33
        $region18: #{reverse.0} parent=12 // loop_footer
          %s16 = sadd.s32 1, %s12
        $region19: #{reverse.0} parent=12 // loop_footer_branch
          %11 = sbr.rel target = $region15
        $region20: #{reverse.0} parent=12 // loop_exit
          _
      $region13: #{reverse.0} parent=4 // pred_fallthru
        _
    $region5: #{reverse.0} parent=1 // pred_fallthru
      _
    %63 = vnop
    %s64 = scalar_lea.vmem [#allocation0], 7
    %v65 = vld [vmem:[%s64] ss:$-1 sm:$0xff]
    %v66 = vrot.slane %v65, 1
    %67 = vst [vmem:[#allocation1] sm:$0xff] %v66
    %s68 = scalar_lea.vmem [#allocation0], 8
    %s69 = scalar_lea.vmem %s68, 7 [#allocation0]
    %v70 = vld [vmem:[%s69] ss:$-1 sm:$0xff]
    %v71 = vrot.slane %v70, 1
    %v72 = vlaneseq
    %v73 = vshrl.u32 %v72, 7
    %vm74 = vcmp.lt.s32.totalorder %v73, 7
    %75 = vst.msk [vmem:[#allocation1] sm:$0xff] %vm74, %v71
    %s76 = scalar_lea.vmem [#allocation1], 8
    %s77 = scalar_lea.vmem [#allocation0], 16
    %s78 = scalar_lea.vmem %s77, 7 [#allocation0]
    %v79 = vld [vmem:[%s78] ss:$-1 sm:$0xff]
    %v80 = vrot.slane %v79, 1
    %81 = vst [vmem:[%s76] sm:$0xff] %v80
    %s82 = scalar_lea.vmem %s77, 8 [#allocation0]
    %s83 = scalar_lea.vmem %s82, 7 [#allocation0]
    %v84 = vld [vmem:[%s83] ss:$-1 sm:$0xff]
    %v85 = vrot.slane %v84, 1
    %v86 = vlaneseq
    %v87 = vshrl.u32 %v86, 7
    %vm88 = vcmp.lt.s32.totalorder %v87, 7
    %89 = vst.msk [vmem:[%s76] sm:$0xff] %vm88, %v85
    %s90 = scalar_lea.vmem [#allocation1], 16
    %s91 = scalar_lea.vmem [#allocation0], 32
    %s92 = scalar_lea.vmem %s91, 7 [#allocation0]
    %v93 = vld [vmem:[%s92] ss:$-1 sm:$0xff]
    %v94 = vrot.slane %v93, 1
    %95 = vst [vmem:[%s90] sm:$0xff] %v94
    %s96 = scalar_lea.vmem %s91, 8 [#allocation0]
    %s97 = scalar_lea.vmem %s96, 7 [#allocation0]
    %v98 = vld [vmem:[%s97] ss:$-1 sm:$0xff]
    %v99 = vrot.slane %v98, 1
    %v100 = vlaneseq
    %v101 = vshrl.u32 %v100, 7
    %vm102 = vcmp.lt.s32.totalorder %v101, 7
    %103 = vst.msk [vmem:[%s90] sm:$0xff] %vm102, %v99
    %s104 = scalar_lea.vmem [#allocation1], 24
    %s105 = scalar_lea.vmem [#allocation0], 48
    %s106 = scalar_lea.vmem %s105, 7 [#allocation0]
    %v107 = vld [vmem:[%s106] ss:$-1 sm:$0xff]
    %v108 = vrot.slane %v107, 1
    %109 = vst [vmem:[%s104] sm:$0xff] %v108
    %s110 = scalar_lea.vmem %s105, 8 [#allocation0]
    %s111 = scalar_lea.vmem %s110, 7 [#allocation0]
    %v112 = vld [vmem:[%s111] ss:$-1 sm:$0xff]
    %v113 = vrot.slane %v112, 1
    %v114 = vlaneseq
    %v115 = vshrl.u32 %v114, 7
    %vm116 = vcmp.lt.s32.totalorder %v115, 7
    %117 = vst.msk [vmem:[%s104] sm:$0xff] %vm116, %v113
    %s118 = scalar_lea.vmem [#allocation1], 32
    %s119 = scalar_lea.vmem [#allocation0], 64
    %s120 = scalar_lea.vmem %s119, 7 [#allocation0]
    %v121 = vld [vmem:[%s120] ss:$-1 sm:$0xff]
    %v122 = vrot.slane %v121, 1
    %123 = vst [vmem:[%s118] sm:$0xff] %v122
    %s124 = scalar_lea.vmem %s119, 8 [#allocation0]
    %s125 = scalar_lea.vmem %s124, 7 [#allocation0]
    %v126 = vld [vmem:[%s125] ss:$-1 sm:$0xff]
    %v127 = vrot.slane %v126, 1
    %v128 = vlaneseq
    %v129 = vshrl.u32 %v128, 7
    %vm130 = vcmp.lt.s32.totalorder %v129, 7
    %131 = vst.msk [vmem:[%s118] sm:$0xff] %vm130, %v127
    %s132 = scalar_lea.vmem [#allocation1], 40
    %s133 = scalar_lea.vmem [#allocation0], 80
    %s134 = scalar_lea.vmem %s133, 7 [#allocation0]
    %v135 = vld [vmem:[%s134] ss:$-1 sm:$0xff]
    %v136 = vrot.slane %v135, 1
    %137 = vst [vmem:[%s132] sm:$0xff] %v136
    %s138 = scalar_lea.vmem %s133, 8 [#allocation0]
    %s139 = scalar_lea.vmem %s138, 7 [#allocation0]
    %v140 = vld [vmem:[%s139] ss:$-1 sm:$0xff]
    %v141 = vrot.slane %v140, 1
    %v142 = vlaneseq
    %v143 = vshrl.u32 %v142, 7
    %vm144 = vcmp.lt.s32.totalorder %v143, 7
    %145 = vst.msk [vmem:[%s132] sm:$0xff] %vm144, %v141
    %s146 = scalar_lea.vmem [#allocation1], 48
    %s147 = scalar_lea.vmem [#allocation0], 96
    %s148 = scalar_lea.vmem %s147, 7 [#allocation0]
    %v149 = vld [vmem:[%s148] ss:$-1 sm:$0xff]
    %v150 = vrot.slane %v149, 1
    %151 = vst [vmem:[%s146] sm:$0xff] %v150
    %s152 = scalar_lea.vmem %s147, 8 [#allocation0]
    %s153 = scalar_lea.vmem %s152, 7 [#allocation0]
    %v154 = vld [vmem:[%s153] ss:$-1 sm:$0xff]
    %v155 = vrot.slane %v154, 1
    %v156 = vlaneseq
    %v157 = vshrl.u32 %v156, 7
    %vm158 = vcmp.lt.s32.totalorder %v157, 7
    %159 = vst.msk [vmem:[%s146] sm:$0xff] %vm158, %v155
    %s160 = scalar_lea.vmem [#allocation1], 56
    %s161 = scalar_lea.vmem [#allocation0], 112
    %s162 = scalar_lea.vmem %s161, 7 [#allocation0]
    %v163 = vld [vmem:[%s162] ss:$-1 sm:$0xff]
    %v164 = vrot.slane %v163, 1
    %165 = vst [vmem:[%s160] sm:$0xff] %v164
    %s166 = scalar_lea.vmem %s161, 8 [#allocation0]
    %s167 = scalar_lea.vmem %s166, 7 [#allocation0]
    %v168 = vld [vmem:[%s167] ss:$-1 sm:$0xff]
    %v169 = vrot.slane %v168, 1
    %v170 = vlaneseq
    %v171 = vshrl.u32 %v170, 7
    %vm172 = vcmp.lt.s32.totalorder %v171, 7
    %173 = vst.msk [vmem:[%s160] sm:$0xff] %vm172, %v169
    // Predicated region
    $region36: #{reverse.0} parent=1 // pred_check
      _
    $region37: #{reverse.0} parent=1 // pred_check_branch
      %175 = sbr.rel (0) target = $region39
    $region38: #{reverse.0} parent=1 // pred_region
      // Predicated region
      $region40: #{reverse.0} parent=38 // pred_check
        _
      $region41: #{reverse.0} parent=38 // pred_check_branch
        %177 = sbr.rel (0) target = $region43
      $region42: #{reverse.0} parent=38 // pred_region
        // Predicated region
        $region55: #{reverse.0} parent=42 // pred_check
          _
        $region56: #{reverse.0} parent=42 // pred_check_branch
          %207 = sbr.rel (0) target = $region58
        $region57: #{reverse.0} parent=42 // pred_region
          loop: start=0, step=1, limit=1
          $region59: #{reverse.0} parent=57 // loop_pre_header
            _
          $region60: #{reverse.0} parent=57 // loop_header
            %s209 = sphi 0, %s213
            %p210 = scmp.ge.s32.totalorder %s209, 1
            %s214 = sphi [#allocation1], [#allocation1]
            %s215 = sphi %s1, %s1
          $region61: #{reverse.0} parent=57 // loop_header_branch
            %212 = sbr.rel (%p210) target = $region65
          $region62: #{reverse.0} parent=57 // loop_body
            %v216 = vld [vmem:[%s214] sm:$0xff]
            %217 = vst [vmem:[%s215] sm:$0xff] %v216
            %v218 = vld [vmem:[%s214 + $0x8] sm:$0xff]
            %219 = vst [vmem:[%s215 + $0x8] sm:$0xff] %v218
            %v220 = vld [vmem:[%s214 + $0x10] sm:$0xff]
            %221 = vst [vmem:[%s215 + $0x10] sm:$0xff] %v220
            %v222 = vld [vmem:[%s214 + $0x18] sm:$0xff]
            %223 = vst [vmem:[%s215 + $0x18] sm:$0xff] %v222
            %v224 = vld [vmem:[%s214 + $0x20] sm:$0xff]
            %225 = vst [vmem:[%s215 + $0x20] sm:$0xff] %v224
            %v226 = vld [vmem:[%s214 + $0x28] sm:$0xff]
            %227 = vst [vmem:[%s215 + $0x28] sm:$0xff] %v226
            %v228 = vld [vmem:[%s214 + $0x30] sm:$0xff]
            %229 = vst [vmem:[%s215 + $0x30] sm:$0xff] %v228
            %v230 = vld [vmem:[%s214 + $0x38] sm:$0xff]
            %231 = vst [vmem:[%s215 + $0x38] sm:$0xff] %v230
          $region63: #{reverse.0} parent=57 // loop_footer
            %s213 = sadd.s32 1, %s209
          $region64: #{reverse.0} parent=57 // loop_footer_branch
            %208 = sbr.rel target = $region60
          $region65: #{reverse.0} parent=57 // loop_exit
            _
        $region58: #{reverse.0} parent=42 // pred_fallthru
          _
        // Predicated region
        $region66: #{reverse.0} parent=42 // pred_check
          _
        $region67: #{reverse.0} parent=42 // pred_check_branch
          %233 = sbr.rel target = $region69
        $region68: #{reverse.0} parent=42 // pred_region
          _
        $region69: #{reverse.0} parent=42 // pred_fallthru
          _
      $region43: #{reverse.0} parent=38 // pred_fallthru
        _
      // Predicated region
      $region44: #{reverse.0} parent=38 // pred_check
        _
      $region45: #{reverse.0} parent=38 // pred_check_branch
        %179 = sbr.rel target = $region47
      $region46: #{reverse.0} parent=38 // pred_region
        %s181 = ssub.s32 256, 1
        loop: start=0, step=1, limit=1
        $region48: #{reverse.0} parent=46 // loop_pre_header
          _
        $region49: #{reverse.0} parent=46 // loop_header
          %s183 = sphi 0, %s187
          %p184 = scmp.ge.s32.totalorder %s183, 1
          %s188 = sphi [#allocation1], [#allocation1]
          %s189 = sphi %s1, %s1
        $region50: #{reverse.0} parent=46 // loop_header_branch
          %186 = sbr.rel (%p184) target = $region54
        $region51: #{reverse.0} parent=46 // loop_body
          %v190 = vld [vmem:[%s188] sm:%s181]
          %191 = vst [vmem:[%s189] sm:%s181] %v190
          %v192 = vld [vmem:[%s188 + $0x8] sm:%s181]
          %193 = vst [vmem:[%s189 + $0x8] sm:%s181] %v192
          %v194 = vld [vmem:[%s188 + $0x10] sm:%s181]
          %195 = vst [vmem:[%s189 + $0x10] sm:%s181] %v194
          %v196 = vld [vmem:[%s188 + $0x18] sm:%s181]
          %197 = vst [vmem:[%s189 + $0x18] sm:%s181] %v196
          %v198 = vld [vmem:[%s188 + $0x20] sm:%s181]
          %199 = vst [vmem:[%s189 + $0x20] sm:%s181] %v198
          %v200 = vld [vmem:[%s188 + $0x28] sm:%s181]
          %201 = vst [vmem:[%s189 + $0x28] sm:%s181] %v200
          %v202 = vld [vmem:[%s188 + $0x30] sm:%s181]
          %203 = vst [vmem:[%s189 + $0x30] sm:%s181] %v202
          %v204 = vld [vmem:[%s188 + $0x38] sm:%s181]
          %205 = vst [vmem:[%s189 + $0x38] sm:%s181] %v204
        $region52: #{reverse.0} parent=46 // loop_footer
          %s187 = sadd.s32 1, %s183
        $region53: #{reverse.0} parent=46 // loop_footer_branch
          %182 = sbr.rel target = $region49
        $region54: #{reverse.0} parent=46 // loop_exit
          _
      $region47: #{reverse.0} parent=38 // pred_fallthru
        _
    $region39: #{reverse.0} parent=1 // pred_fallthru
      _
    %234 = vnop

// kernel: fourier_layer2d.3
$region0: #{fourier_layer2d.3}
  #allocation0 [shape = 'u32[]', space=smem, size = 0x4, offset = 0x4, fixed_abs, tag = 'smem constant byte address 0x4 - core index']
  #allocation1 [shape = 'u32[72,128]{1,0:T(1,128)}', space=vmem, size = 0x9000, scoped, tag = 'internal scratch']
  %s0 = inlined_call_operand.vmem [shape: f32[4,4], index: 0, kind: input, shape index: {}]
  %s1 = inlined_call_operand.vmem [shape: f32[4,1], index: 1, kind: input, shape index: {}]
  %s2 = inlined_call_operand.vmem [shape: f32[2,4,256], index: 2, kind: input, shape index: {}]
  %s3 = inlined_call_operand.vmem [shape: f32[2,4,256], index: 3, kind: input, shape index: {}]
  %s4 = inlined_call_operand.vmem [shape: f32[2,4,256], index: 4, kind: output, shape index: {}]
  %s5 = sld [smem:[#allocation0]]
  $region49: #{fourier_layer2d.3} parent=0
    _
  %s7 = ssub.s32 1, %s5
  %s8 = scalar_select 0, %s7, %s5
  loop: start=0, step=1, limit=4
  $region2: #{fourier_layer2d.3} parent=0 // loop_pre_header
    _
  $region3: #{fourier_layer2d.3} parent=0 // loop_header
    %s10 = sphi 0, %s14
    %p11 = scmp.ge.s32.totalorder %s10, 4
    %s17 = sphi 0, %s29
    %s18 = sphi 0, %s25
    %s19 = sphi 0, %s17
    %s20 = sphi 0, %s18
    %s21 = sphi 0, %s19
    %s22 = sphi 0, %s20
    %s30 = sphi 0, %s30
    %s32 = sphi 0, %s30
    %s33 = sphi 0, %s32
    %s47 = sphi 0, %s33
    %s51 = sphi 0, %s51
    %s53 = sphi 0, %s51
    %s54 = sphi 0, %s53
    %s68 = sphi 0, %s54
    %s76 = sphi 0, %s78
    %s79 = sphi 0, %s76
    %s80 = sphi 0, %s79
    %s96 = sphi 0, %s80
    %s104 = sphi 0, %s106
    %s107 = sphi 0, %s104
    %s108 = sphi 0, %s107
    %s124 = sphi 0, %s108
    %s132 = sphi 0, %s134
    %s135 = sphi 0, %s132
    %s136 = sphi 0, %s135
    %s152 = sphi 0, %s136
  $region4: #{fourier_layer2d.3} parent=0 // loop_header_branch
    %13 = sbr.rel (%p11) target = $region8
  $region5: #{fourier_layer2d.3} parent=0 // loop_body
    %s15 = ssub.s32 %s10, 1
    %s16 = ssub.s32 %s10, 2
    %s23 = sadd.s32 1, %s18
    %p24 = scmp.ge.s32.totalorder %s23, 1
    %s25 = scalar_select %p24, 0, %s23
    %s26 = sadd.s32 1, %s17
    %s27 = scalar_select %p24, %s26, %s17
    %p28 = scmp.ge.s32.totalorder %s27, 2
    %s29 = scalar_select %p28, 0, %s27
    %s31 = sadd.s32 %s30, 1
    %p34 = scmp.eq.s32.totalorder %s10, 1
    %p35 = scmp.ne.s32.totalorder %s30, %s32
    %p36 = scmp.eq.s32.totalorder %s10, 0
    %p37 = por %p35, %p36
    %p38 = scmp.ne.s32.totalorder %s30, %s32
    %p39 = scmp.eq.s32.totalorder %s15, 1
    %p40 = por %p38, %p39
    %p41 = scmp.ne.s32.totalorder %s32, %s33
    %p42 = scmp.eq.s32.totalorder %s15, 0
    %p43 = por %p41, %p42
    %p44 = scmp.ne.s32.totalorder %s32, %s33
    %p45 = scmp.eq.s32.totalorder %s16, 1
    %p46 = por %p44, %p45
    %p48 = scmp.ne.s32.totalorder %s33, %s47
    %p49 = scmp.eq.s32.totalorder %s16, 0
    %p50 = por %p48, %p49
    %s52 = sadd.s32 %s51, 1
    %p55 = scmp.eq.s32.totalorder %s10, 1
    %p56 = scmp.ne.s32.totalorder %s51, %s53
    %p57 = scmp.eq.s32.totalorder %s10, 0
    %p58 = por %p56, %p57
    %p59 = scmp.ne.s32.totalorder %s51, %s53
    %p60 = scmp.eq.s32.totalorder %s15, 1
    %p61 = por %p59, %p60
    %p62 = scmp.ne.s32.totalorder %s53, %s54
    %p63 = scmp.eq.s32.totalorder %s15, 0
    %p64 = por %p62, %p63
    %p65 = scmp.ne.s32.totalorder %s53, %s54
    %p66 = scmp.eq.s32.totalorder %s16, 1
    %p67 = por %p65, %p66
    %p69 = scmp.ne.s32.totalorder %s54, %s68
    %p70 = scmp.eq.s32.totalorder %s16, 0
    %p71 = por %p69, %p70
    %s72 = ssub.s32 %s17, %s29
    %s73 = ssub.s32 %s18, %s25
    %s74 = sor.u32 %s72, %s73
    %p75 = scmp.eq.s32.totalorder %s74, 0
    %s77 = sadd.s32 %s76, 1
    %s78 = scalar_select %p75, %s76, %s77
    %p81 = pneg %p75
    %p82 = scmp.eq.s32.totalorder %s10, 1
    %p83 = por %p81, %p82
    %p84 = scmp.ne.s32.totalorder %s76, %s79
    %p85 = scmp.eq.s32.totalorder %s10, 0
    %p86 = por %p84, %p85
    %p87 = scmp.ne.s32.totalorder %s76, %s79
    %p88 = scmp.eq.s32.totalorder %s15, 1
    %p89 = por %p87, %p88
    %p90 = scmp.ne.s32.totalorder %s79, %s80
    %p91 = scmp.eq.s32.totalorder %s15, 0
    %p92 = por %p90, %p91
    %p93 = scmp.ne.s32.totalorder %s79, %s80
    %p94 = scmp.eq.s32.totalorder %s16, 1
    %p95 = por %p93, %p94
    %p97 = scmp.ne.s32.totalorder %s80, %s96
    %p98 = scmp.eq.s32.totalorder %s16, 0
    %p99 = por %p97, %p98
    %s100 = ssub.s32 %s17, %s29
    %s101 = ssub.s32 %s18, %s25
    %s102 = sor.u32 %s100, %s101
    %p103 = scmp.eq.s32.totalorder %s102, 0
    %s105 = sadd.s32 %s104, 1
    %s106 = scalar_select %p103, %s104, %s105
    %p109 = pneg %p103
    %p110 = scmp.eq.s32.totalorder %s10, 1
    %p111 = por %p109, %p110
    %p112 = scmp.ne.s32.totalorder %s104, %s107
    %p113 = scmp.eq.s32.totalorder %s10, 0
    %p114 = por %p112, %p113
    %p115 = scmp.ne.s32.totalorder %s104, %s107
    %p116 = scmp.eq.s32.totalorder %s15, 1
    %p117 = por %p115, %p116
    %p118 = scmp.ne.s32.totalorder %s107, %s108
    %p119 = scmp.eq.s32.totalorder %s15, 0
    %p120 = por %p118, %p119
    %p121 = scmp.ne.s32.totalorder %s107, %s108
    %p122 = scmp.eq.s32.totalorder %s16, 1
    %p123 = por %p121, %p122
    %p125 = scmp.ne.s32.totalorder %s108, %s124
    %p126 = scmp.eq.s32.totalorder %s16, 0
    %p127 = por %p125, %p126
    %s128 = ssub.s32 %s17, %s29
    %s129 = ssub.s32 %s18, %s25
    %s130 = sor.u32 %s128, %s129
    %p131 = scmp.eq.s32.totalorder %s130, 0
    %s133 = sadd.s32 %s132, 1
    %s134 = scalar_select %p131, %s132, %s133
    %p137 = pneg %p131
    %p138 = scmp.eq.s32.totalorder %s10, 1
    %p139 = por %p137, %p138
    %p140 = scmp.ne.s32.totalorder %s132, %s135
    %p141 = scmp.eq.s32.totalorder %s10, 0
    %p142 = por %p140, %p141
    %p143 = scmp.ne.s32.totalorder %s132, %s135
    %p144 = scmp.eq.s32.totalorder %s15, 1
    %p145 = por %p143, %p144
    %p146 = scmp.ne.s32.totalorder %s135, %s136
    %p147 = scmp.eq.s32.totalorder %s15, 0
    %p148 = por %p146, %p147
    %p149 = scmp.ne.s32.totalorder %s135, %s136
    %p150 = scmp.eq.s32.totalorder %s16, 1
    %p151 = por %p149, %p150
    %p153 = scmp.ne.s32.totalorder %s136, %s152
    %p154 = scmp.eq.s32.totalorder %s16, 0
    %p155 = por %p153, %p154
    %p156 = scmp.le.s32.totalorder 1, %s10
    %p157 = scmp.lt.s32.totalorder %s10, 3
    %p158 = pnand %p156, %p157
    %p159 = pneg %p158
    // Predicated region
    $region9: #{fourier_layer2d.3} parent=5 // pred_check
      _
    $region10: #{fourier_layer2d.3} parent=5 // pred_check_branch
      %161 = sbr.rel (%p158) target = $region12
    $region11: #{fourier_layer2d.3} parent=5 // pred_region
      %s162 = ssub.s32 %s10, 1
      // Predicated region
      $region13: #{fourier_layer2d.3} parent=11 // pred_check
        %p163 = pneg %p43
      $region14: #{fourier_layer2d.3} parent=11 // pred_check_branch
        %165 = sbr.rel (%p163) target = $region16
      $region15: #{fourier_layer2d.3} parent=11 // pred_region
        _
      $region16: #{fourier_layer2d.3} parent=11 // pred_fallthru
        _
      // Predicated region
      $region17: #{fourier_layer2d.3} parent=11 // pred_check
        %p166 = pneg %p64
      $region18: #{fourier_layer2d.3} parent=11 // pred_check_branch
        %168 = sbr.rel (%p166) target = $region20
      $region19: #{fourier_layer2d.3} parent=11 // pred_region
        _
      $region20: #{fourier_layer2d.3} parent=11 // pred_fallthru
        _
    $region12: #{fourier_layer2d.3} parent=5 // pred_fallthru
      _
    %p169 = scmp.lt.s32.totalorder %s10, 2
    // Predicated region
    $region21: #{fourier_layer2d.3} parent=5 // pred_check
      %p170 = pneg %p169
    $region22: #{fourier_layer2d.3} parent=5 // pred_check_branch
      %172 = sbr.rel (%p170) target = $region24
    $region23: #{fourier_layer2d.3} parent=5 // pred_region
      // Predicated region
      $region25: #{fourier_layer2d.3} parent=23 // pred_check
        %p173 = pneg %p86
      $region26: #{fourier_layer2d.3} parent=23 // pred_check_branch
        %175 = sbr.rel (%p173) target = $region28
      $region27: #{fourier_layer2d.3} parent=23 // pred_region
        %s176 = smul.u32 2, %s18
        %p177 = scmp.lt.s32.totalorder %s17, 1
        %s178 = scalar_select %p177, %s17, 1
        %p179 = scmp.lt.s32.totalorder %s176, 1
        %s180 = scalar_select %p179, %s176, 1
        %s181 = smul.addr %s178, 2
        %s182 = sadd.s32 %s180, %s181
        %s183 = smul.addr %s182, 4
        %s184 = scalar_lea.vmem %s2, %s183
        %s185 = smul.u32 2, %s18
      $region28: #{fourier_layer2d.3} parent=23 // pred_fallthru
        _
      // Predicated region
      $region29: #{fourier_layer2d.3} parent=23 // pred_check
        %p186 = pneg %p114
      $region30: #{fourier_layer2d.3} parent=23 // pred_check_branch
        %188 = sbr.rel (%p186) target = $region32
      $region31: #{fourier_layer2d.3} parent=23 // pred_region
        %s189 = smul.u32 2, %s18
        %p190 = scmp.lt.s32.totalorder %s17, 1
        %s191 = scalar_select %p190, %s17, 1
        %p192 = scmp.lt.s32.totalorder %s189, 1
        %s193 = scalar_select %p192, %s189, 1
        %s194 = smul.addr %s191, 2
        %s195 = sadd.s32 %s193, %s194
        %s196 = smul.addr %s195, 4
        %s197 = scalar_lea.vmem %s3, %s196
        %s198 = smul.u32 2, %s18
      $region32: #{fourier_layer2d.3} parent=23 // pred_fallthru
        _
    $region24: #{fourier_layer2d.3} parent=5 // pred_fallthru
      _
    %p199 = scmp.le.s32.totalorder 1, %s10
    %p200 = scmp.lt.s32.totalorder %s10, 3
    %p201 = pnand %p199, %p200
    %p202 = pneg %p201
    // Predicated region
    $region33: #{fourier_layer2d.3} parent=5 // pred_check
      _
    $region34: #{fourier_layer2d.3} parent=5 // pred_check_branch
      %204 = sbr.rel (%p201) target = $region36
    $region35: #{fourier_layer2d.3} parent=5 // pred_region
      %s205 = ssub.s32 %s10, 1
      %p206 = pneg %p43
      %p207 = pneg %p40
      %p208 = pneg %p64
      %p209 = pneg %p61
      %s210 = smul.u32 2, %s20
      %p211 = scmp.lt.s32.totalorder %s19, 1
      %s212 = scalar_select %p211, %s19, 1
      %p213 = scmp.lt.s32.totalorder %s210, 1
      %s214 = scalar_select %p213, %s210, 1
      %s215 = smul.addr %s212, 2
      %s216 = sadd.s32 %s214, %s215
      %s217 = smul.addr %s216, 4
      %s218 = scalar_lea.vmem %s2, %s217
      %p219 = pneg %p92
      %p220 = pneg %p89
      %s221 = smul.u32 2, %s20
      %p222 = scmp.lt.s32.totalorder %s19, 1
      %s223 = scalar_select %p222, %s19, 1
      %p224 = scmp.lt.s32.totalorder %s221, 1
      %s225 = scalar_select %p224, %s221, 1
      %s226 = smul.addr %s223, 2
      %s227 = sadd.s32 %s225, %s226
      %s228 = smul.addr %s227, 4
      %s229 = scalar_lea.vmem %s3, %s228
      %p230 = pneg %p120
      %p231 = pneg %p117
      %p232 = pneg %p148
      %p233 = pneg %p145
      %s234 = smul.u32 2, %s20
      %p235 = scmp.lt.s32.totalorder %s19, 1
      %s236 = scalar_select %p235, %s19, 1
      %p237 = scmp.lt.s32.totalorder %s234, 1
      %s238 = scalar_select %p237, %s234, 1
      %s239 = smul.addr %s236, 2
      %s240 = sadd.s32 %s238, %s239
      %s241 = smul.addr %s240, 4
      %s242 = scalar_lea.vmem %s4, %s241
      %s243 = smul.u32 2, %s20
      %p244 = scmp.lt.s32.totalorder %s19, 1
      %s245 = scalar_select %p244, %s19, 1
      %p246 = scmp.lt.s32.totalorder %s243, 1
      %s247 = scalar_select %p246, %s243, 1
      %s248 = smul.addr %s245, 2
      %s249 = sadd.s32 %s247, %s248
      %s250 = smul.addr %s249, 4
      %s251 = scalar_lea.vmem %s2, %s250
      %s252 = smul.u32 2, %s20
      %s253 = smul.u32 2, %s20
      %p254 = scmp.lt.s32.totalorder %s19, 1
      %s255 = scalar_select %p254, %s19, 1
      %p256 = scmp.lt.s32.totalorder %s253, 1
      %s257 = scalar_select %p256, %s253, 1
      %s258 = smul.addr %s255, 2
      %s259 = sadd.s32 %s257, %s258
      %s260 = smul.addr %s259, 4
      %s261 = scalar_lea.vmem %s3, %s260
      %s262 = smul.u32 2, %s20
      %s263 = smul.u32 2, %s20
      %p264 = scmp.lt.s32.totalorder %s19, 1
      %s265 = scalar_select %p264, %s19, 1
      %p266 = scmp.lt.s32.totalorder %s263, 1
      %s267 = scalar_select %p266, %s263, 1
      %s268 = smul.addr %s265, 2
      %s269 = sadd.s32 %s267, %s268
      %s270 = smul.addr %s269, 4
      %s271 = scalar_lea.vmem %s4, %s270
      %s272 = smul.u32 2, %s20
      %v273 = vld [vmem:[%s0] sm:$0xf]
      %v274 = vld [vmem:[%s251] sm:$0xff]
      %v275 = vld [vmem:[%s1] sm:$0xf]
      %277 = vset.pattern.permute.xlu0 0
      %278 = vperm.xlu0 %277, %v275
      %v279 = vpop.permute.xlu0 %278
      %282 = vst [vmem:[#allocation1] ss:$2 sm:$0xff] %v274
      %v283 = vld.sshfl [vmem:[#allocation1] sm:$0xff pattern:$0x75316420]
      %v284 = vld.sshfl [vmem:[#allocation1 + $0x8] sm:$0xff pattern:$0x75316420]
      %vm285 = vcmask 31744
      %v287 = vsel %vm285, %v273, 0
      %vm289 = vcmask 1043456
      %v290 = vsel %vm289, %v283, 0
      %v292 = vsel %vm289, %v284, 0
      %294 = vmatpush.msra.mxu0 0.0
      %295 = vmatpush.msra.mxu0 0.0
      %296 = vmatpush.msra.mxu0 0.0
      %297 = vmatpush.msra.mxu0 0.0
      %298 = vmatpush.msra.mxu0 0.0
      %299 = vmatpush.msra.mxu0 0.0
      %300 = vmatpush.msra.mxu0 0.0
      %301 = vmatpush.msra.mxu0 0.0
      %302 = vmatpush.msra.mxu0 0.0
      %303 = vmatpush.msra.mxu0 0.0
      %304 = vmatpush.msra.mxu0 0.0
      %305 = vmatpush.msra.mxu0 0.0
      %306 = vmatpush.msra.mxu0 0.0
      %307 = vmatpush.msra.mxu0 0.0
      %308 = vmatpush.msra.mxu0 0.0
      %309 = vmatpush.msra.mxu0 %v290
      %310 = vmatmul.f32.gmra.mxu0 %v287
      %v311 = vpop.f32.mrf.mxu0
      %v312 = vadd.f32 %v279, %v311
      %313 = vdwg.mxu0
      %314 = vmatpush.msra.mxu0 0.0
      %315 = vmatpush.msra.mxu0 0.0
      %316 = vmatpush.msra.mxu0 0.0
      %317 = vmatpush.msra.mxu0 0.0
      %318 = vmatpush.msra.mxu0 0.0
      %319 = vmatpush.msra.mxu0 0.0
      %320 = vmatpush.msra.mxu0 0.0
      %321 = vmatpush.msra.mxu0 0.0
      %322 = vmatpush.msra.mxu0 0.0
      %323 = vmatpush.msra.mxu0 0.0
      %324 = vmatpush.msra.mxu0 0.0
      %325 = vmatpush.msra.mxu0 0.0
      %326 = vmatpush.msra.mxu0 0.0
      %327 = vmatpush.msra.mxu0 0.0
      %328 = vmatpush.msra.mxu0 0.0
      %329 = vmatpush.msra.mxu0 %v292
      %330 = vmatmul.f32.gmra.mxu0 %v287
      %v331 = vpop.f32.mrf.mxu0
      %v332 = vadd.f32 %v279, %v331
      %333 = vdwg.mxu0
      %v334 = vld [vmem:[%s261] sm:$0xff]
      %336 = vst [vmem:[#allocation1] ss:$2 sm:$0xff] %v334
      %v337 = vld.sshfl [vmem:[#allocation1] sm:$0xff pattern:$0x75316420]
      %v338 = vld.sshfl [vmem:[#allocation1 + $0x8] sm:$0xff pattern:$0x75316420]
      %v341 = vadd.f32 %v312, %v337
      %v342 = vadd.f32 %v332, %v338
      %v343 = vmul.f32 %v341, 0.5
      %v344 = vmul.f32 %v342, 0.5
      %v345 = vmul.f32 %v341, 0.70710677
      %v346 = vmul.f32 %v342, 0.70710677
      %v347 = vmul.f32 %v345, %v345
      %v348 = vmin.f32 16.0, %v347
      %v349 = vmul.f32 %v348, 2.1237322e-06
      %v350 = vadd.f32 %v349, 0.00028619796
      %v351 = vmul.f32 %v348, %v350
      %v352 = vadd.f32 %v351, 0.0036580483
      %v353 = vmul.f32 %v348, %v352
      %v354 = vadd.f32 %v353, 0.05243302
      %v355 = vmul.f32 %v348, %v354
      %v356 = vadd.f32 %v355, 0.18741608
      %v357 = vmul.f32 %v348, %v356
      %v358 = vadd.f32 %v357, 1.1283791
      %v359 = vmul.f32 %v345, %v358
      %v360 = vmul.f32 %v348, 3.8918573e-05
      %v361 = vadd.f32 %v360, 0.001143296
      %v362 = vmul.f32 %v348, %v361
      %v363 = vadd.f32 %v362, 0.014752088
      %v364 = vmul.f32 %v348, %v363
      %v365 = vadd.f32 %v364, 0.112945676
      %v366 = vmul.f32 %v348, %v365
      %v367 = vadd.f32 %v366, 0.4994258
      %v368 = vmul.f32 %v348, %v367
      %v369 = vadd.f32 %v368, 1.0
      %v370 = vrcp.pop %v369
      %v371 = vmul.f32 %v369, %v370
      %v372 = vsub.f32 1.0, %v371
      %v373 = vmul.f32 %v370, %v372
      %v374 = vadd.f32 %v370, %v373
      %vm375 = vweird.f32 %v369
      %vm376 = vweird.f32 %v370
      %vm377 = vmor %vm375, %vm376
      %v378 = vsel %vm377, %v370, %v374
      %v379 = vand.u32 2147483647, %v369
      %vm380 = vcmp.eq.f32.partialorder %v379, 8.507059e+37
      %v381 = vand.u32 %v369, 2147483648
      %v382 = vor.u32 1.1754944e-38, %v381
      %v383 = vsel %vm380, %v382, %v378
      %v384 = vmul.f32 %v359, %v383
      %v385 = vmin.f32 %v384, 1.0
      %v386 = vmax.f32 %v385, -1.0
      %v387 = vmul.f32 %v346, %v346
      %v388 = vmin.f32 16.0, %v387
      %v389 = vmul.f32 %v388, 2.1237322e-06
      %v390 = vadd.f32 %v389, 0.00028619796
      %v391 = vmul.f32 %v388, %v390
      %v392 = vadd.f32 %v391, 0.0036580483
      %v393 = vmul.f32 %v388, %v392
      %v394 = vadd.f32 %v393, 0.05243302
      %v395 = vmul.f32 %v388, %v394
      %v396 = vadd.f32 %v395, 0.18741608
      %v397 = vmul.f32 %v388, %v396
      %v398 = vadd.f32 %v397, 1.1283791
      %v399 = vmul.f32 %v346, %v398
      %v400 = vmul.f32 %v388, 3.8918573e-05
      %v401 = vadd.f32 %v400, 0.001143296
      %v402 = vmul.f32 %v388, %v401
      %v403 = vadd.f32 %v402, 0.014752088
      %v404 = vmul.f32 %v388, %v403
      %v405 = vadd.f32 %v404, 0.112945676
      %v406 = vmul.f32 %v388, %v405
      %v407 = vadd.f32 %v406, 0.4994258
      %v408 = vmul.f32 %v388, %v407
      %v409 = vadd.f32 %v408, 1.0
      %v410 = vrcp.pop %v409
      %v411 = vmul.f32 %v409, %v410
      %v412 = vsub.f32 1.0, %v411
      %v413 = vmul.f32 %v410, %v412
      %v414 = vadd.f32 %v410, %v413
      %vm415 = vweird.f32 %v409
      %vm416 = vweird.f32 %v410
      %vm417 = vmor %vm415, %vm416
      %v418 = vsel %vm417, %v410, %v414
      %v419 = vand.u32 2147483647, %v409
      %vm420 = vcmp.eq.f32.partialorder %v419, 8.507059e+37
      %v421 = vand.u32 %v409, 2147483648
      %v422 = vor.u32 1.1754944e-38, %v421
      %v423 = vsel %vm420, %v422, %v418
      %v424 = vmul.f32 %v399, %v423
      %v425 = vmin.f32 %v424, 1.0
      %v426 = vmax.f32 %v425, -1.0
      %v427 = vadd.f32 %v386, 1.0
      %v428 = vadd.f32 %v426, 1.0
      %v429 = vmul.f32 %v343, %v427
      %v430 = vmul.f32 %v344, %v428
      %431 = vst [vmem:[#allocation1] ss:$2 sm:$0xff] %v274
      %v432 = vld.sshfl [vmem:[#allocation1] sm:$0xff pattern:$0x75316420]
      %v433 = vld.sshfl [vmem:[#allocation1 + $0x8] sm:$0xff pattern:$0x75316420]
      %v436 = vadd.f32 %v429, %v432
      %v437 = vadd.f32 %v430, %v433
      %v440 = vrot.slane %v437, 4
      %v441 = vsel %vm289, %v436, %v440
      %443 = vst [vmem:[%s271] sm:$0xff] %v441
      %s444 = smul.u32 2, %s20
      %p445 = scmp.lt.s32.totalorder %s19, 1
      %s446 = scalar_select %p445, %s19, 1
      %p447 = scmp.lt.s32.totalorder %s444, 1
      %s448 = scalar_select %p447, %s444, 1
      %s449 = smul.addr %s446, 2
      %s450 = sadd.s32 %s448, %s449
      %s451 = smul.addr %s450, 4
      %s452 = scalar_lea.vmem %s4, %s451
      // Predicated region
      $region37: #{fourier_layer2d.3} parent=35 // pred_check
        %p453 = pneg %p145
      $region38: #{fourier_layer2d.3} parent=35 // pred_check_branch
        %455 = sbr.rel (%p453) target = $region40
      $region39: #{fourier_layer2d.3} parent=35 // pred_region
        %s456 = smul.u32 2, %s20
      $region40: #{fourier_layer2d.3} parent=35 // pred_fallthru
        _
    $region36: #{fourier_layer2d.3} parent=5 // pred_fallthru
      _
    %p457 = scmp.le.s32.totalorder 2, %s10
    // Predicated region
    $region41: #{fourier_layer2d.3} parent=5 // pred_check
      %p458 = pneg %p457
    $region42: #{fourier_layer2d.3} parent=5 // pred_check_branch
      %460 = sbr.rel (%p458) target = $region44
    $region43: #{fourier_layer2d.3} parent=5 // pred_region
      %s461 = ssub.s32 %s10, 2
      // Predicated region
      $region45: #{fourier_layer2d.3} parent=43 // pred_check
        %p462 = pneg %p151
      $region46: #{fourier_layer2d.3} parent=43 // pred_check_branch
        %464 = sbr.rel (%p462) target = $region48
      $region47: #{fourier_layer2d.3} parent=43 // pred_region
        %s465 = smul.u32 2, %s22
        %p466 = scmp.lt.s32.totalorder %s21, 1
        %s467 = scalar_select %p466, %s21, 1
        %p468 = scmp.lt.s32.totalorder %s465, 1
        %s469 = scalar_select %p468, %s465, 1
        %s470 = smul.addr %s467, 2
        %s471 = sadd.s32 %s469, %s470
        %s472 = smul.addr %s471, 4
        %s473 = scalar_lea.vmem %s4, %s472
      $region48: #{fourier_layer2d.3} parent=43 // pred_fallthru
        _
    $region44: #{fourier_layer2d.3} parent=5 // pred_fallthru
      _
  $region6: #{fourier_layer2d.3} parent=0 // loop_footer
    %s14 = sadd.s32 1, %s10
  $region7: #{fourier_layer2d.3} parent=0 // loop_footer_branch
    %9 = sbr.rel target = $region3
  $region8: #{fourier_layer2d.3} parent=0 // loop_exit
    _

</llo_original>
